<compile_context>
chip_gen: v7x
topology: tpu7x:2x2x1
jax: 0.10.0
libtpu: 0.0.40
codegen_flags: <defaults>
</compile_context>

<pallas_src>
import functools

import jax
import jax.numpy as jnp
from jax.experimental import pallas as pl
from jax.experimental.pallas import tpu as pltpu

EPS = 1e-5
LANE = 128       # pad every channel dim to a multiple of the TPU lane width
SUBLANE = 8
# Known-safe everywhere; v5e/v6e (128 MiB VMEM) can raise this to 64-96 MiB.
VMEM_LIMIT = 32 * 1024 * 1024


def _round_up(x, m):
    return (x + m - 1) // m * m


def _cp(dims):
    return pltpu.CompilerParams(dimension_semantics=dims,
                                vmem_limit_bytes=VMEM_LIMIT)


# ----------------------------- Pallas kernels --------------------------------

def _stats_kernel(x_ref, stats_ref, *, m_valid):
    """Per-block partial (sum, sum-of-squares) over rows; padded rows masked."""
    bm = x_ref.shape[0]
    rows = jax.lax.broadcasted_iota(jnp.int32, (bm, 1), 0) + pl.program_id(0) * bm
    x = jnp.where(rows < m_valid, x_ref[...].astype(jnp.float32), 0.0)
    stats_ref[0:1, :] = jnp.sum(x, axis=0, keepdims=True)
    stats_ref[1:2, :] = jnp.sum(x * x, axis=0, keepdims=True)


def _bn_relu_matmul_stats_kernel(x_ref, scale_ref, shift_ref, w_ref,
                                 o_ref, stats_ref, *, m_valid):
    """Fused BN + ReLU + 1x1-conv matmul; also emits partial (sum, sumsq) of the
    output so the next BatchNorm needs no extra HBM pass."""
    bm = x_ref.shape[0]
    a = jnp.maximum(x_ref[...].astype(jnp.float32) * scale_ref[...] + shift_ref[...], 0.0)
    y = jnp.dot(a.astype(jnp.bfloat16), w_ref[...], preferred_element_type=jnp.float32)
    o_ref[...] = y.astype(o_ref.dtype)
    rows = jax.lax.broadcasted_iota(jnp.int32, (bm, 1), 0) + pl.program_id(0) * bm
    ym = jnp.where(rows < m_valid, y, 0.0)
    stats_ref[0:1, :] = jnp.sum(ym, axis=0, keepdims=True)
    stats_ref[1:2, :] = jnp.sum(ym * ym, axis=0, keepdims=True)


def _bn_relu_matmul_add_kernel(x_ref, scale_ref, shift_ref, w_ref, res_ref, o_ref):
    """relu(bn(x)) @ w + residual (identity shortcut, bf16 residual input)."""
    a = jnp.maximum(x_ref[...].astype(jnp.float32) * scale_ref[...] + shift_ref[...], 0.0)
    y = jnp.dot(a.astype(jnp.bfloat16), w_ref[...], preferred_element_type=jnp.float32)
    o_ref[...] = (y + res_ref[...].astype(jnp.float32)).astype(o_ref.dtype)


def _bn_relu_matmul_proj_kernel(x_ref, scale_ref, shift_ref, w_ref,
                                xs_ref, scale_s_ref, shift_s_ref, ws_ref, o_ref):
    """relu(bn3(x)) @ w3  +  relu(bn1(x_strided)) @ w_sc
    (projection shortcut fused in as a second MXU matmul per block)."""
    a = jnp.maximum(x_ref[...].astype(jnp.float32) * scale_ref[...] + shift_ref[...], 0.0)
    y = jnp.dot(a.astype(jnp.bfloat16), w_ref[...], preferred_element_type=jnp.float32)
    s = jnp.maximum(xs_ref[...].astype(jnp.float32) * scale_s_ref[...] + shift_s_ref[...], 0.0)
    y = y + jnp.dot(s.astype(jnp.bfloat16), ws_ref[...], preferred_element_type=jnp.float32)
    o_ref[...] = y.astype(o_ref.dtype)


def _conv3x3_kernel(x_ref, scale_ref, shift_ref, w_ref, o_ref, stats_ref,
                    pad_ref, *, H, W, Wo, stride, tr):
    """Fused BN2 + ReLU + 3x3 conv (pad=1, stride s) for one (image, row-tile).

    grid = (N, Ho // tr).  At t == 0 the BN+ReLU'd image is written (in row
    chunks) into a zero-bordered VMEM halo scratch that persists across the row
    tiles of this image; every step then accumulates 9 shifted-tap matmuls for
    its `tr` output rows in a small f32 accumulator (strided taps for stride>1)
    and emits partial (sum, sumsq) of the output for the following BatchNorm.
    """
    t = pl.program_id(1)
    cin = x_ref.shape[-1]
    cout = w_ref.shape[-1]
    Wp = pad_ref.shape[1]

    @pl.when(t == 0)
    def _():
        scale = scale_ref[...].reshape(1, 1, cin)
        shift = shift_ref[...].reshape(1, 1, cin)
        # Zero only the 1-pixel border; the interior is fully overwritten below.
        zrow = jnp.zeros((1, Wp, cin), pad_ref.dtype)
        pad_ref[0:1, :, :] = zrow
        pad_ref[H + 1:H + 2, :, :] = zrow
        pad_ref[1:H + 1, 0:1, :] = jnp.zeros((H, 1, cin), pad_ref.dtype)
        pad_ref[1:H + 1, W + 1:Wp, :] = jnp.zeros((H, Wp - W - 1, cin), pad_ref.dtype)
        rc = SUBLANE if H % SUBLANE == 0 else H   # fill in row chunks (bounded live range)
        for r in range(0, H, rc):
            a = jnp.maximum(x_ref[0, r:r + rc].astype(jnp.float32) * scale + shift, 0.0)
            pad_ref[1 + r:1 + r + rc, 1:W + 1, :] = a.astype(pad_ref.dtype)

    r0 = t * tr                                   # first output row of this tile
    acc = jnp.zeros((tr * Wo, cout), jnp.float32)
    for dh in range(3):
        for dw in range(3):
            if stride == 1:
                patch = pad_ref[pl.ds(r0 + dh, tr), pl.ds(dw, Wo), :]
            else:
                patch = pad_ref[pl.ds(r0 * stride + dh, tr, stride=stride),
                                pl.ds(dw, Wo, stride=stride), :]
            acc = acc + jnp.dot(patch.reshape(tr * Wo, cin).astype(jnp.bfloat16),
                                w_ref[dh * 3 + dw],
                                preferred_element_type=jnp.float32)
    o_ref[0] = acc.astype(o_ref.dtype)
    stats_ref[0:1, :] = jnp.sum(acc, axis=0, keepdims=True)
    stats_ref[1:2, :] = jnp.sum(acc * acc, axis=0, keepdims=True)


# ----------------------------- pallas_call wrappers ---------------------------

def _block_rows(m, block_m):
    bm = min(_round_up(block_m, SUBLANE), _round_up(m, SUBLANE))
    return bm, pl.cdiv(m, bm)


def batch_stats(x2d, block_m):
    """Tiled per-channel batch (mean, biased var) over the row axis of (M, C)."""
    m, c = x2d.shape
    bm, g = _block_rows(m, block_m)
    stats = pl.pallas_call(
        functools.partial(_stats_kernel, m_valid=m),
        grid=(g,),
        in_specs=[pl.BlockSpec((bm, c), lambda i: (i, 0))],
        out_specs=pl.BlockSpec((8, c), lambda i: (i, 0)),
        out_shape=jax.ShapeDtypeStruct((8 * g, c), jnp.float32),
        compiler_params=_cp(("parallel",)),
    )(x2d)
    stats = stats.reshape(g, 8, c)
    # TODO(synk): E[x^2]-mean^2 cancels badly when |mean| >> std; production
    # inputs would want a shifted / Welford-style reduction.
    mean = jnp.sum(stats[:, 0, :], axis=0) / m
    var = jnp.sum(stats[:, 1, :], axis=0) / m - mean * mean
    return mean, var


def conv1x1_bn_relu_stats(x2d, scale, shift, w, block_m):
    m, k = x2d.shape
    n = w.shape[1]
    bm, g = _block_rows(m, block_m)
    out, stats = pl.pallas_call(
        functools.partial(_bn_relu_matmul_stats_kernel, m_valid=m),
        grid=(g,),
        in_specs=[pl.BlockSpec((bm, k), lambda i: (i, 0)),
                  pl.BlockSpec((1, k), lambda i: (0, 0)),
                  pl.BlockSpec((1, k), lambda i: (0, 0)),
                  pl.BlockSpec((k, n), lambda i: (0, 0))],
        out_specs=(pl.BlockSpec((bm, n), lambda i: (i, 0)),
                   pl.BlockSpec((8, n), lambda i: (i, 0))),
        out_shape=(jax.ShapeDtypeStruct((m, n), jnp.bfloat16),
                   jax.ShapeDtypeStruct((8 * g, n), jnp.float32)),
        compiler_params=_cp(("parallel",)),
    )(x2d, scale, shift, w)
    stats = stats.reshape(g, 8, n)
    mean = jnp.sum(stats[:, 0, :], axis=0) / m
    var = jnp.sum(stats[:, 1, :], axis=0) / m - mean * mean
    return out, mean, var


def conv1x1_bn_relu_add(x2d, scale, shift, w, res2d, block_m):
    m, k = x2d.shape
    n = w.shape[1]
    bm, g = _block_rows(m, block_m)
    return pl.pallas_call(
        _bn_relu_matmul_add_kernel,
        grid=(g,),
        in_specs=[pl.BlockSpec((bm, k), lambda i: (i, 0)),
                  pl.BlockSpec((1, k), lambda i: (0, 0)),
                  pl.BlockSpec((1, k), lambda i: (0, 0)),
                  pl.BlockSpec((k, n), lambda i: (0, 0)),
                  pl.BlockSpec((bm, n), lambda i: (i, 0))],
        out_specs=pl.BlockSpec((bm, n), lambda i: (i, 0)),
        out_shape=jax.ShapeDtypeStruct((m, n), jnp.float32),
        compiler_params=_cp(("parallel",)),
    )(x2d, scale, shift, w, res2d)


def conv1x1_bn_relu_proj_add(x2d, scale, shift, w, xs2d, scale_s, shift_s, ws, block_m):
    m, k = x2d.shape
    n = w.shape[1]
    ks = xs2d.shape[1]
    bm, g = _block_rows(m, block_m)
    return pl.pallas_call(
        _bn_relu_matmul_proj_kernel,
        grid=(g,),
        in_specs=[pl.BlockSpec((bm, k), lambda i: (i, 0)),
                  pl.BlockSpec((1, k), lambda i: (0, 0)),
                  pl.BlockSpec((1, k), lambda i: (0, 0)),
                  pl.BlockSpec((k, n), lambda i: (0, 0)),
                  pl.BlockSpec((bm, ks), lambda i: (i, 0)),
                  pl.BlockSpec((1, ks), lambda i: (0, 0)),
                  pl.BlockSpec((1, ks), lambda i: (0, 0)),
                  pl.BlockSpec((ks, n), lambda i: (0, 0))],
        out_specs=pl.BlockSpec((bm, n), lambda i: (i, 0)),
        out_shape=jax.ShapeDtypeStruct((m, n), jnp.float32),
        compiler_params=_cp(("parallel",)),
    )(x2d, scale, shift, w, xs2d, scale_s, shift_s, ws)


def conv3x3_bn_relu_stats(x4d, scale, shift, w9, stride, row_tile=8):
    """Fused BN+ReLU+3x3 conv (pad=1, stride s); returns (N*Ho*Wo, Cout) bf16
    plus the batch (mean, var) of the output for the following BatchNorm."""
    n, H, W, cin = x4d.shape
    cout = w9.shape[-1]
    assert H % stride == 0 and W % stride == 0
    Ho, Wo = H // stride, W // stride
    tr = min(row_tile, Ho)
    while Ho % tr:
        tr -= 1
    nt = Ho // tr
    Wp = _round_up(W + 2, SUBLANE)   # sublane-padded halo width (row starts aligned)

    # TODO(synk): the halo scratch could be stored bf16 (half the VMEM / store
    # traffic); kept f32 here so the strided tap reads stay on the 32-bit path.
    kernel = functools.partial(_conv3x3_kernel, H=H, W=W, Wo=Wo, stride=stride, tr=tr)
    out, stats = pl.pallas_call(
        kernel,
        grid=(n, nt),
        in_specs=[pl.BlockSpec((1, H, W, cin), lambda b, t: (b, 0, 0, 0)),
                  pl.BlockSpec((1, cin), lambda b, t: (0, 0)),
                  pl.BlockSpec((1, cin), lambda b, t: (0, 0)),
                  pl.BlockSpec((9, cin, cout), lambda b, t: (0, 0, 0))],
        out_specs=(pl.BlockSpec((1, tr * Wo, cout), lambda b, t: (b, t, 0)),
                   pl.BlockSpec((8, cout), lambda b, t: (b * nt + t, 0))),
        out_shape=(jax.ShapeDtypeStruct((n, Ho * Wo, cout), jnp.bfloat16),
                   jax.ShapeDtypeStruct((8 * n * nt, cout), jnp.float32)),
        scratch_shapes=[pltpu.VMEM((H + 2, Wp, cin), jnp.float32)],
        compiler_params=_cp(("parallel", "arbitrary")),
    )(x4d, scale, shift, w9)
    m = n * Ho * Wo
    stats = stats.reshape(n * nt, 8, cout)
    mean = jnp.sum(stats[:, 0, :], axis=0) / m
    var = jnp.sum(stats[:, 1, :], axis=0) / m - mean * mean
    return out.reshape(m, cout), mean, var


# ----------------------------- forward pass -----------------------------------

def preact_bottleneck_forward(x_nchw, params, stride, block_m=1024, conv_row_tile=8):
    # block_m=1024 suits v5e/v6e (128 MiB VMEM); use ~512 on v7x (64 MiB / TC).
    expansion = 4
    x = jnp.transpose(x_nchw, (0, 2, 3, 1))                     # NCHW -> NHWC
    N, H, W, cin = x.shape
    planes = params["w1"].shape[0]
    out_planes = expansion * planes
    assert H % stride == 0 and W % stride == 0
    Ho, Wo = H // stride, W // stride

    cin_p = _round_up(cin, LANE)
    cmid_p = _round_up(planes, LANE)
    cout_p = _round_up(out_planes, LANE)

    # Lane-pad channels (padded lanes stay exactly 0) and store activations in
    # bf16: the 1x1 stages are HBM-bound, BN / statistics math stays f32 in-kernel.
    xp = jnp.pad(x.astype(jnp.float32),
                 ((0, 0), (0, 0), (0, 0), (0, cin_p - cin))).astype(jnp.bfloat16)
    x2d = xp.reshape(-1, cin_p)

    def pad_gb(g, b, cp):
        g = jnp.pad(g.astype(jnp.float32), (0, cp - g.shape[0]), constant_values=1.0)
        b = jnp.pad(b.astype(jnp.float32), (0, cp - b.shape[0]))
        return g, b

    g1, b1 = pad_gb(params["gamma1"], params["beta1"], cin_p)
    g2, b2 = pad_gb(params["gamma2"], params["beta2"], cmid_p)
    g3, b3 = pad_gb(params["gamma3"], params["beta3"], cmid_p)

    def pad_w(w2d, kp, npad):
        return jnp.pad(w2d, ((0, kp - w2d.shape[0]),
                             (0, npad - w2d.shape[1]))).astype(jnp.bfloat16)

    w1m = pad_w(params["w1"][:, :, 0, 0].T, cin_p, cmid_p)          # (Cin_p, Cmid_p)
    w3m = pad_w(params["w3"][:, :, 0, 0].T, cmid_p, cout_p)         # (Cmid_p, Cout_p)
    w2 = jnp.transpose(params["w2"], (2, 3, 1, 0))                  # (3,3,in,out)
    w2 = jnp.pad(w2, ((0, 0), (0, 0), (0, cmid_p - planes), (0, cmid_p - planes)))
    w2m = w2.reshape(9, cmid_p, cmid_p).astype(jnp.bfloat16)

    def to_scale_shift(gamma, beta, mean, var):
        scale = gamma * jax.lax.rsqrt(var + EPS)
        shift = beta - mean * scale
        return scale.reshape(1, -1), shift.reshape(1, -1)

    # --- bn1: the only BatchNorm needing its own (tiled) reduction pass ---
    mean1, var1 = batch_stats(x2d, block_m)
    scale1, shift1 = to_scale_shift(g1, b1, mean1, var1)

    # --- conv1 (1x1): fused bn1+relu+matmul, also emits bn2 partial stats ---
    out1_2d, mean2, var2 = conv1x1_bn_relu_stats(x2d, scale1, shift1, w1m, block_m)
    scale2, shift2 = to_scale_shift(g2, b2, mean2, var2)

    # --- conv2 (3x3, stride s): fused bn2+relu+conv, emits bn3 partial stats ---
    out2_2d, mean3, var3 = conv3x3_bn_relu_stats(
        out1_2d.reshape(N, H, W, cmid_p), scale2, shift2, w2m, stride,
        row_tile=conv_row_tile)
    scale3, shift3 = to_scale_shift(g3, b3, mean3, var3)

    # --- conv3 (1x1) + residual; projection shortcut fused as a 2nd matmul ---
    has_proj = (stride != 1) or (cin != out_planes)
    if has_proj:
        # TODO(synk): express this stride-s subsample via a BlockSpec index_map on
        # a reshaped (N, Ho, s, Wo, s*C) view instead of an XLA-level strided slice.
        xs2d = xp[:, ::stride, ::stride, :].reshape(-1, cin_p)
        wsm = pad_w(params["w_sc"][:, :, 0, 0].T, cin_p, cout_p)
        out_2d = conv1x1_bn_relu_proj_add(out2_2d, scale3, shift3, w3m,
                                          xs2d, scale1, shift1, wsm, block_m)
    else:
        out_2d = conv1x1_bn_relu_add(out2_2d, scale3, shift3, w3m, x2d, block_m)

    out = out_2d[:, :out_planes].reshape(N, Ho, Wo, out_planes)
    return jnp.transpose(out, (0, 3, 1, 2))                         # NHWC -> NCHW


# ----------------------------- pure-JAX reference ------------------------------

def _reference(x, params, stride):
    def bn(x, g, b):
        m = x.mean(axis=(0, 2, 3), keepdims=True)
        v = ((x - m) ** 2).mean(axis=(0, 2, 3), keepdims=True)
        return g.reshape(1, -1, 1, 1) * (x - m) / jnp.sqrt(v + EPS) + b.reshape(1, -1, 1, 1)

    def conv(x, w, s, p):
        return jax.lax.conv_general_dilated(
            x, w, (s, s), [(p, p), (p, p)],
            dimension_numbers=("NCHW", "OIHW", "NCHW"))

    out = jax.nn.relu(bn(x, params["gamma1"], params["beta1"]))
    shortcut = conv(out, params["w_sc"], stride, 0) if "w_sc" in params else x
    out = conv(out, params["w1"], 1, 0)
    out = conv(jax.nn.relu(bn(out, params["gamma2"], params["beta2"])), params["w2"], stride, 1)
    out = conv(jax.nn.relu(bn(out, params["gamma3"], params["beta3"])), params["w3"], 1, 0)
    return out + shortcut


# ----------------------------- main --------------------------------------------

if __name__ == "__main__":
    key = jax.random.PRNGKey(0)
    ks = jax.random.split(key, 24)

    def make_params(in_planes, planes, stride, keys, expansion=4):
        p = {
            "gamma1": 1.0 + 0.1 * jax.random.normal(keys[0], (in_planes,), jnp.float32),
            "beta1": 0.1 * jax.random.normal(keys[1], (in_planes,), jnp.float32),
            "gamma2": 1.0 + 0.1 * jax.random.normal(keys[2], (planes,), jnp.float32),
            "beta2": 0.1 * jax.random.normal(keys[3], (planes,), jnp.float32),
            "gamma3": 1.0 + 0.1 * jax.random.normal(keys[4], (planes,), jnp.float32),
            "beta3": 0.1 * jax.random.normal(keys[5], (planes,), jnp.float32),
            "w1": 0.2 * jax.random.normal(keys[6], (planes, in_planes, 1, 1), jnp.float32),
            "w2": 0.2 * jax.random.normal(keys[7], (planes, planes, 3, 3), jnp.float32),
            "w3": 0.2 * jax.random.normal(keys[8], (expansion * planes, planes, 1, 1), jnp.float32),
        }
        if stride != 1 or in_planes != expansion * planes:
            p["w_sc"] = 0.2 * jax.random.normal(
                keys[9], (expansion * planes, in_planes, 1, 1), jnp.float32)
        return p

    # bf16 activations + bf16 MXU matmuls with f32 accumulation -> loose tolerance
    ATOL = RTOL = 5e-2

    # --- config 1: stride-2 block with projection shortcut ---
    x1 = jax.random.normal(ks[0], (2, 4, 16, 16), jnp.float32)
    params1 = make_params(4, 4, 2, ks[1:11])
    # small toy shapes: block_m=256 so the row grids actually have >1 step
    out1 = jax.block_until_ready(preact_bottleneck_forward(x1, params1, 2, block_m=256))
    ref1 = _reference(x1, params1, 2)
    assert out1.shape == ref1.shape, (out1.shape, ref1.shape)
    err1 = float(jnp.max(jnp.abs(out1 - ref1)))
    assert jnp.allclose(out1, ref1, atol=ATOL, rtol=RTOL), err1

    # --- config 2: stride-1 block with identity shortcut (in_planes == 4*planes) ---
    x2 = jax.random.normal(ks[11], (2, 16, 16, 16), jnp.float32)
    params2 = make_params(16, 4, 1, ks[12:22])
    out2 = jax.block_until_ready(preact_bottleneck_forward(x2, params2, 1, block_m=256))
    ref2 = _reference(x2, params2, 1)
    assert out2.shape == ref2.shape, (out2.shape, ref2.shape)
    err2 = float(jnp.max(jnp.abs(out2 - ref2)))
    assert jnp.allclose(out2, ref2, atol=ATOL, rtol=RTOL), err2

    print("KERNEL_OK")
</pallas_src>

<mosaic_0001>
module attributes {stable_mosaic.version = 11 : i64} {
  func.func @_stats_kernel(%arg0: i32, %arg1: memref<256x128xbf16, #tpu.memory_space<vmem>>, %arg2: memref<8x128xf32, #tpu.memory_space<vmem>>) attributes {dimension_semantics = [#tpu.dimension_semantics<parallel>], iteration_bounds = array<i64: 2>, scalar_prefetch = 0 : i64, scratch_operands = 0 : i64, tpu.core_type = #tpu.core_type<tc>, window_params = [{transform_indices = @transform_0, window_bounds = array<i64: 256, 128>}, {transform_indices = @transform_1, window_bounds = array<i64: 8, 128>}]} {
    %0 = tpu.iota {dimensions = array<i32: 0>} : vector<256x1xi32>
    %c256_i32 = arith.constant 256 : i32
    %1 = arith.muli %arg0, %c256_i32 : i32
    %2 = vector.broadcast %1 : i32 to vector<256x1xi32>
    %3 = arith.addi %0, %2 : vector<256x1xi32>
    %c512_i32 = arith.constant 512 : i32
    %4 = vector.broadcast %c512_i32 : i32 to vector<256x1xi32>
    %5 = arith.cmpi slt, %3, %4 : vector<256x1xi32>
    %c0 = arith.constant 0 : index
    %c0_0 = arith.constant 0 : index
    %6 = vector.load %arg1[%c0, %c0_0] : memref<256x128xbf16, #tpu.memory_space<vmem>>, vector<256x128xbf16>
    %7 = arith.extf %6 : vector<256x128xbf16> to vector<256x128xf32>
    %cst = arith.constant 0.000000e+00 : f32
    %8 = vector.shape_cast %5 : vector<256x1xi1> to vector<256x1xi1>
    %9 = vector.broadcast %8 : vector<256x1xi1> to vector<256x128xi1>
    %10 = vector.broadcast %cst : f32 to vector<256x128xf32>
    %11 = arith.select %9, %7, %10 : vector<256x128xi1>, vector<256x128xf32>
    %cst_1 = arith.constant dense<0.000000e+00> : vector<128xf32>
    %12 = vector.multi_reduction <add>, %11, %cst_1 [0] : vector<256x128xf32> to vector<128xf32>
    %13 = vector.shape_cast %12 : vector<128xf32> to vector<1x128xf32>
    %c0_2 = arith.constant 0 : index
    %c0_3 = arith.constant 0 : index
    %14 = vector.load %arg2[%c0_2, %c0_3] : memref<8x128xf32, #tpu.memory_space<vmem>>, vector<1x128xf32>
    tpu.vector_store %arg2[%c0_2, %c0_3], %13 {strides = array<i32>} : memref<8x128xf32, #tpu.memory_space<vmem>>, vector<1x128xf32>,
    %15 = arith.mulf %11, %11 : vector<256x128xf32>
    %cst_4 = arith.constant dense<0.000000e+00> : vector<128xf32>
    %16 = vector.multi_reduction <add>, %15, %cst_4 [0] : vector<256x128xf32> to vector<128xf32>
    %17 = vector.shape_cast %16 : vector<128xf32> to vector<1x128xf32>
    %c1 = arith.constant 1 : index
    %c0_5 = arith.constant 0 : index
    %18 = vector.load %arg2[%c1, %c0_5] : memref<8x128xf32, #tpu.memory_space<vmem>>, vector<1x128xf32>
    tpu.vector_store %arg2[%c1, %c0_5], %17 {strides = array<i32>} : memref<8x128xf32, #tpu.memory_space<vmem>>, vector<1x128xf32>,
    return
  }
  func.func @transform_0(%arg0: i32) -> (i32, i32) {
    %c0_i32 = arith.constant 0 : i32
    %c0_i32_0 = arith.constant 0 : i32
    return %arg0, %c0_i32 : i32, i32
  }
  func.func @transform_1(%arg0: i32) -> (i32, i32) {
    %c0_i32 = arith.constant 0 : i32
    %c0_i32_0 = arith.constant 0 : i32
    return %arg0, %c0_i32 : i32, i32
  }
}

</mosaic_0001>

<llo_original>
// kernel: tpu_custom_call.1
$region0: #{tpu_custom_call.1}
  #allocation0 [shape = 'u32[]', space=smem, size = 0x4, offset = 0x4, fixed_abs, tag = 'smem constant byte address 0x4 - core index']
  #allocation1 [shape = 'u32[144,128]{1,0:T(1,128)}', space=vmem, size = 0x12000, scoped, tag = 'internal scratch']
  %s0 = inlined_call_operand.hbm [shape: bf16[512,128], index: 0, kind: input, shape index: {}]
  %s1 = inlined_call_operand.hbm [shape: f32[16,128], index: 1, kind: output, shape index: {}]
  %s2 = sld [smem:[#allocation0]]
  $region41: #{tpu_custom_call.1} parent=0
    _
  %s4 = ssub.s32 1, %s2
  %s5 = scalar_select 0, %s4, %s2
  $region1: #{tpu_custom_call.1} parent=0
    #allocation2 [shape = 'u8[131072]{0}', space=vmem, size = 0x20000, scoped, tag = 'input window, operand 0']
    #allocation3 [shape = 's32[2]{0}', space=sflag, size = 0x8, scoped, tag = 'scoped memory for tpu_custom_call.1']
    #allocation4 [shape = 's32[2]{0}', space=sflag, size = 0x8, scoped, tag = 'scoped memory for tpu_custom_call.1']
    #allocation5 [shape = 'u8[8192]{0}', space=vmem, size = 0x2000, scoped, tag = 'output window, operand 0']
    %6 = vsyncpa [#allocation3], 0
    %s7 = scalar_lea.sflag [#allocation3], 1
    %8 = vsyncpa %s7, 0
    %9 = vsyncpa [#allocation4], 0
    %s10 = scalar_lea.sflag [#allocation4], 1
    %11 = vsyncpa %s10, 0
    loop: start=0, step=1, limit=4
    $region2: #{tpu_custom_call.1} parent=1 // loop_pre_header
      _
    $region3: #{tpu_custom_call.1} parent=1 // loop_header
      %s13 = sphi 0, %s17
      %p14 = scmp.ge.s32.totalorder %s13, 4
      %s23 = sphi 0, %s25
      %s26 = sphi 0, %s23
      %s27 = sphi 0, %s26
      %s43 = sphi 0, %s27
      %s49 = sphi 0, %s51
      %s52 = sphi 0, %s49
      %s53 = sphi 0, %s52
      %s69 = sphi 0, %s53
    $region4: #{tpu_custom_call.1} parent=1 // loop_header_branch
      %16 = sbr.rel (%p14) target = $region8
    $region5: #{tpu_custom_call.1} parent=1 // loop_body
      %s18 = ssub.s32 %s13, 1
      %s19 = ssub.s32 %s13, 2
      %s20 = sadd.s32 %s13, 1
      %s21 = ssub.s32 %s13, %s20
      %p22 = scmp.eq.s32.totalorder %s21, 0
      %s24 = sadd.s32 %s23, 1
      %s25 = scalar_select %p22, %s23, %s24
      %p28 = pneg %p22
      %p29 = scmp.eq.s32.totalorder %s13, 1
      %p30 = por %p28, %p29
      %p31 = scmp.ne.s32.totalorder %s23, %s26
      %p32 = scmp.eq.s32.totalorder %s13, 0
      %p33 = por %p31, %p32
      %p34 = scmp.ne.s32.totalorder %s23, %s26
      %p35 = scmp.eq.s32.totalorder %s18, 1
      %p36 = por %p34, %p35
      %p37 = scmp.ne.s32.totalorder %s26, %s27
      %p38 = scmp.eq.s32.totalorder %s18, 0
      %p39 = por %p37, %p38
      %p40 = scmp.ne.s32.totalorder %s26, %s27
      %p41 = scmp.eq.s32.totalorder %s19, 1
      %p42 = por %p40, %p41
      %p44 = scmp.ne.s32.totalorder %s27, %s43
      %p45 = scmp.eq.s32.totalorder %s19, 0
      %p46 = por %p44, %p45
      %s47 = ssub.s32 %s13, %s20
      %p48 = scmp.eq.s32.totalorder %s47, 0
      %s50 = sadd.s32 %s49, 1
      %s51 = scalar_select %p48, %s49, %s50
      %p54 = pneg %p48
      %p55 = scmp.eq.s32.totalorder %s13, 1
      %p56 = por %p54, %p55
      %p57 = scmp.ne.s32.totalorder %s49, %s52
      %p58 = scmp.eq.s32.totalorder %s13, 0
      %p59 = por %p57, %p58
      %p60 = scmp.ne.s32.totalorder %s49, %s52
      %p61 = scmp.eq.s32.totalorder %s18, 1
      %p62 = por %p60, %p61
      %p63 = scmp.ne.s32.totalorder %s52, %s53
      %p64 = scmp.eq.s32.totalorder %s18, 0
      %p65 = por %p63, %p64
      %p66 = scmp.ne.s32.totalorder %s52, %s53
      %p67 = scmp.eq.s32.totalorder %s19, 1
      %p68 = por %p66, %p67
      %p70 = scmp.ne.s32.totalorder %s53, %s69
      %p71 = scmp.eq.s32.totalorder %s19, 0
      %p72 = por %p70, %p71
      %p73 = scmp.le.s32.totalorder 1, %s13
      %p74 = scmp.lt.s32.totalorder %s13, 3
      %p75 = pnand %p73, %p74
      %p76 = pneg %p75
      // Predicated region
      $region9: #{tpu_custom_call.1} parent=5 // pred_check
        _
      $region10: #{tpu_custom_call.1} parent=5 // pred_check_branch
        %78 = sbr.rel (%p75) target = $region12
      $region11: #{tpu_custom_call.1} parent=5 // pred_region
        %s79 = ssub.s32 %s13, 1
      $region12: #{tpu_custom_call.1} parent=5 // pred_fallthru
        _
      %p80 = scmp.lt.s32.totalorder %s13, 2
      // Predicated region
      $region13: #{tpu_custom_call.1} parent=5 // pred_check
        %p81 = pneg %p80
      $region14: #{tpu_custom_call.1} parent=5 // pred_check_branch
        %83 = sbr.rel (%p81) target = $region16
      $region15: #{tpu_custom_call.1} parent=5 // pred_region
        // Predicated region
        $region17: #{tpu_custom_call.1} parent=15 // pred_check
          %p84 = pneg %p33
        $region18: #{tpu_custom_call.1} parent=15 // pred_check_branch
          %86 = sbr.rel (%p84) target = $region20
        $region19: #{tpu_custom_call.1} parent=15 // pred_region
          %s87 = sand.u32 %s23, 1
          %s88 = scalar_lea.sflag [#allocation3], %s87
          %s89 = sand.u32 %s23, 1
          %s90 = smul.addr %s89, 128
          %s91 = scalar_lea.vmem [#allocation2], %s90
          %s92 = smul.u32 32, %s13
          %s94 = ssub.s32 2048, 2048
          %95 = vsyncadd %s88, %s94
          %s96 = smul.addr %s92, 64
          %s97 = scalar_lea.hbm %s0, %s96
          %s98 = sshll.u32 %s91, 4
          %s99 = int_to_ptr.vmem [resolvable:$true] %s98
          %104 = dma.hbm_to_vmem [thread:$0]  %s97, 2048, %s99, %s88, 64, 64, 4
        $region20: #{tpu_custom_call.1} parent=15 // pred_fallthru
          _
      $region16: #{tpu_custom_call.1} parent=5 // pred_fallthru
        _
      %p105 = scmp.le.s32.totalorder 1, %s13
      %p106 = scmp.lt.s32.totalorder %s13, 3
      %p107 = pnand %p105, %p106
      %p108 = pneg %p107
      // Predicated region
      $region21: #{tpu_custom_call.1} parent=5 // pred_check
        _
      $region22: #{tpu_custom_call.1} parent=5 // pred_check_branch
        %110 = sbr.rel (%p107) target = $region24
      $region23: #{tpu_custom_call.1} parent=5 // pred_region
        %s111 = ssub.s32 %s13, 1
        %s112 = sand.u32 %s26, 1
        %s113 = scalar_lea.sflag [#allocation3], %s112
        %s114 = sand.u32 %s26, 1
        %s115 = smul.addr %s114, 128
        %s116 = scalar_lea.vmem [#allocation2], %s115
        // Predicated region
        $region25: #{tpu_custom_call.1} parent=23 // pred_check
          %p117 = pneg %p39
        $region26: #{tpu_custom_call.1} parent=23 // pred_check_branch
          %119 = sbr.rel (%p117) target = $region28
        $region27: #{tpu_custom_call.1} parent=23 // pred_region
          %120 = dma.done %s113, 2048
        $region28: #{tpu_custom_call.1} parent=23 // pred_fallthru
          _
        %s121 = sand.u32 %s26, 1
        %s122 = scalar_lea.sflag [#allocation3], %s121
        %s123 = sand.u32 %s26, 1
        %s124 = smul.addr %s123, 128
        %s125 = scalar_lea.vmem [#allocation2], %s124
        %p126 = pneg %p39
        %p127 = pneg %p36
        %p128 = pneg %p65
        %p129 = pneg %p62
        %s130 = sand.u32 %s52, 1
        %s131 = scalar_lea.sflag [#allocation4], %s130
        %s132 = sand.u32 %s52, 1
        %s133 = smul.addr %s132, 8
        %s134 = scalar_lea.vmem [#allocation5], %s133
        %s135 = smul.u32 32, %s18
        %v136 = vlaneseq
        %v137 = vshrl.u32 %v136, 7
        %v138 = vadd.s32 %v137, 8
        %v139 = vadd.s32 %v137, 16
        %v140 = vadd.s32 %v137, 24
        %v141 = vadd.s32 %v137, 32
        %v142 = vadd.s32 %v137, 40
        %v143 = vadd.s32 %v137, 48
        %v144 = vadd.s32 %v137, 56
        %v145 = vadd.s32 %v137, 64
        %v146 = vadd.s32 %v137, 72
        %v147 = vadd.s32 %v137, 80
        %v148 = vadd.s32 %v137, 88
        %v149 = vadd.s32 %v137, 96
        %v150 = vadd.s32 %v137, 104
        %v151 = vadd.s32 %v137, 112
        %v152 = vadd.s32 %v137, 120
        %v153 = vadd.s32 %v137, 128
        %v154 = vadd.s32 %v137, 136
        %v155 = vadd.s32 %v137, 144
        %v156 = vadd.s32 %v137, 152
        %v157 = vadd.s32 %v137, 160
        %v158 = vadd.s32 %v137, 168
        %v159 = vadd.s32 %v137, 176
        %v160 = vadd.s32 %v137, 184
        %v161 = vadd.s32 %v137, 192
        %v162 = vadd.s32 %v137, 200
        %v163 = vadd.s32 %v137, 208
        %v164 = vadd.s32 %v137, 216
        %v165 = vadd.s32 %v137, 224
        %v166 = vadd.s32 %v137, 232
        %v167 = vadd.s32 %v137, 240
        %v168 = vadd.s32 %v137, 248
        %s169 = smul.u32 %s18, 256
        %v170 = vstv %s169
        %v171 = vadd.s32 %v137, %v170
        %v172 = vadd.s32 %v138, %v170
        %v173 = vadd.s32 %v139, %v170
        %v174 = vadd.s32 %v140, %v170
        %v175 = vadd.s32 %v141, %v170
        %v176 = vadd.s32 %v142, %v170
        %v177 = vadd.s32 %v143, %v170
        %v178 = vadd.s32 %v144, %v170
        %v179 = vadd.s32 %v145, %v170
        %v180 = vadd.s32 %v146, %v170
        %v181 = vadd.s32 %v147, %v170
        %v182 = vadd.s32 %v148, %v170
        %v183 = vadd.s32 %v149, %v170
        %v184 = vadd.s32 %v150, %v170
        %v185 = vadd.s32 %v151, %v170
        %v186 = vadd.s32 %v152, %v170
        %v187 = vadd.s32 %v153, %v170
        %v188 = vadd.s32 %v154, %v170
        %v189 = vadd.s32 %v155, %v170
        %v190 = vadd.s32 %v156, %v170
        %v191 = vadd.s32 %v157, %v170
        %v192 = vadd.s32 %v158, %v170
        %v193 = vadd.s32 %v159, %v170
        %v194 = vadd.s32 %v160, %v170
        %v195 = vadd.s32 %v161, %v170
        %v196 = vadd.s32 %v162, %v170
        %v197 = vadd.s32 %v163, %v170
        %v198 = vadd.s32 %v164, %v170
        %v199 = vadd.s32 %v165, %v170
        %v200 = vadd.s32 %v166, %v170
        %v201 = vadd.s32 %v167, %v170
        %v202 = vadd.s32 %v168, %v170
        %vm203 = vcmp.lt.s32.totalorder %v171, 512
        %vm204 = vcmp.lt.s32.totalorder %v172, 512
        %vm205 = vcmp.lt.s32.totalorder %v173, 512
        %vm206 = vcmp.lt.s32.totalorder %v174, 512
        %vm207 = vcmp.lt.s32.totalorder %v175, 512
        %vm208 = vcmp.lt.s32.totalorder %v176, 512
        %vm209 = vcmp.lt.s32.totalorder %v177, 512
        %vm210 = vcmp.lt.s32.totalorder %v178, 512
        %vm211 = vcmp.lt.s32.totalorder %v179, 512
        %vm212 = vcmp.lt.s32.totalorder %v180, 512
        %vm213 = vcmp.lt.s32.totalorder %v181, 512
        %vm214 = vcmp.lt.s32.totalorder %v182, 512
        %vm215 = vcmp.lt.s32.totalorder %v183, 512
        %vm216 = vcmp.lt.s32.totalorder %v184, 512
        %vm217 = vcmp.lt.s32.totalorder %v185, 512
        %vm218 = vcmp.lt.s32.totalorder %v186, 512
        %vm219 = vcmp.lt.s32.totalorder %v187, 512
        %vm220 = vcmp.lt.s32.totalorder %v188, 512
        %vm221 = vcmp.lt.s32.totalorder %v189, 512
        %vm222 = vcmp.lt.s32.totalorder %v190, 512
        %vm223 = vcmp.lt.s32.totalorder %v191, 512
        %vm224 = vcmp.lt.s32.totalorder %v192, 512
        %vm225 = vcmp.lt.s32.totalorder %v193, 512
        %vm226 = vcmp.lt.s32.totalorder %v194, 512
        %vm227 = vcmp.lt.s32.totalorder %v195, 512
        %vm228 = vcmp.lt.s32.totalorder %v196, 512
        %vm229 = vcmp.lt.s32.totalorder %v197, 512
        %vm230 = vcmp.lt.s32.totalorder %v198, 512
        %vm231 = vcmp.lt.s32.totalorder %v199, 512
        %vm232 = vcmp.lt.s32.totalorder %v200, 512
        %vm233 = vcmp.lt.s32.totalorder %v201, 512
        %vm234 = vcmp.lt.s32.totalorder %v202, 512
        %v235 = vld [vmem:[%s116] sm:$0xf]
        %v236 = vld [vmem:[%s116 + $0x4] sm:$0xf]
        %v237 = vld [vmem:[%s116 + $0x8] sm:$0xf]
        %v238 = vld [vmem:[%s116 + $0xc] sm:$0xf]
        %v239 = vld [vmem:[%s116 + $0x10] sm:$0xf]
        %v240 = vld [vmem:[%s116 + $0x14] sm:$0xf]
        %v241 = vld [vmem:[%s116 + $0x18] sm:$0xf]
        %v242 = vld [vmem:[%s116 + $0x1c] sm:$0xf]
        %v243 = vld [vmem:[%s116 + $0x20] sm:$0xf]
        %v244 = vld [vmem:[%s116 + $0x24] sm:$0xf]
        %v245 = vld [vmem:[%s116 + $0x28] sm:$0xf]
        %v246 = vld [vmem:[%s116 + $0x2c] sm:$0xf]
        %v247 = vld [vmem:[%s116 + $0x30] sm:$0xf]
        %v248 = vld [vmem:[%s116 + $0x34] sm:$0xf]
        %v249 = vld [vmem:[%s116 + $0x38] sm:$0xf]
        %v250 = vld [vmem:[%s116 + $0x3c] sm:$0xf]
        %v251 = vld [vmem:[%s116 + $0x40] sm:$0xf]
        %v252 = vld [vmem:[%s116 + $0x44] sm:$0xf]
        %v253 = vld [vmem:[%s116 + $0x48] sm:$0xf]
        %v254 = vld [vmem:[%s116 + $0x4c] sm:$0xf]
        %v255 = vld [vmem:[%s116 + $0x50] sm:$0xf]
        %v256 = vld [vmem:[%s116 + $0x54] sm:$0xf]
        %v257 = vld [vmem:[%s116 + $0x58] sm:$0xf]
        %v258 = vld [vmem:[%s116 + $0x5c] sm:$0xf]
        %v259 = vld [vmem:[%s116 + $0x60] sm:$0xf]
        %v260 = vld [vmem:[%s116 + $0x64] sm:$0xf]
        %v261 = vld [vmem:[%s116 + $0x68] sm:$0xf]
        %v262 = vld [vmem:[%s116 + $0x6c] sm:$0xf]
        %v263 = vld [vmem:[%s116 + $0x70] sm:$0xf]
        %v264 = vld [vmem:[%s116 + $0x74] sm:$0xf]
        %v265 = vld [vmem:[%s116 + $0x78] sm:$0xf]
        %v266 = vld [vmem:[%s116 + $0x7c] sm:$0xf]
        %v267 = vunpack.c.l.bf16 %v235
        %v268 = vunpack.c.l.bf16 %v236
        %v269 = vunpack.c.l.bf16 %v237
        %v270 = vunpack.c.l.bf16 %v238
        %v271 = vunpack.c.l.bf16 %v239
        %v272 = vunpack.c.l.bf16 %v240
        %v273 = vunpack.c.l.bf16 %v241
        %v274 = vunpack.c.l.bf16 %v242
        %v275 = vunpack.c.l.bf16 %v243
        %v276 = vunpack.c.l.bf16 %v244
        %v277 = vunpack.c.l.bf16 %v245
        %v278 = vunpack.c.l.bf16 %v246
        %v279 = vunpack.c.l.bf16 %v247
        %v280 = vunpack.c.l.bf16 %v248
        %v281 = vunpack.c.l.bf16 %v249
        %v282 = vunpack.c.l.bf16 %v250
        %v283 = vunpack.c.l.bf16 %v251
        %v284 = vunpack.c.l.bf16 %v252
        %v285 = vunpack.c.l.bf16 %v253
        %v286 = vunpack.c.l.bf16 %v254
        %v287 = vunpack.c.l.bf16 %v255
        %v288 = vunpack.c.l.bf16 %v256
        %v289 = vunpack.c.l.bf16 %v257
        %v290 = vunpack.c.l.bf16 %v258
        %v291 = vunpack.c.l.bf16 %v259
        %v292 = vunpack.c.l.bf16 %v260
        %v293 = vunpack.c.l.bf16 %v261
        %v294 = vunpack.c.l.bf16 %v262
        %v295 = vunpack.c.l.bf16 %v263
        %v296 = vunpack.c.l.bf16 %v264
        %v297 = vunpack.c.l.bf16 %v265
        %v298 = vunpack.c.l.bf16 %v266
        %v299 = vsel %vm203, 1, 0
        %v300 = vsel %vm204, 1, 0
        %v301 = vsel %vm205, 1, 0
        %v302 = vsel %vm206, 1, 0
        %v303 = vsel %vm207, 1, 0
        %v304 = vsel %vm208, 1, 0
        %v305 = vsel %vm209, 1, 0
        %v306 = vsel %vm210, 1, 0
        %v307 = vsel %vm211, 1, 0
        %v308 = vsel %vm212, 1, 0
        %v309 = vsel %vm213, 1, 0
        %v310 = vsel %vm214, 1, 0
        %v311 = vsel %vm215, 1, 0
        %v312 = vsel %vm216, 1, 0
        %v313 = vsel %vm217, 1, 0
        %v314 = vsel %vm218, 1, 0
        %v315 = vsel %vm219, 1, 0
        %v316 = vsel %vm220, 1, 0
        %v317 = vsel %vm221, 1, 0
        %v318 = vsel %vm222, 1, 0
        %v319 = vsel %vm223, 1, 0
        %v320 = vsel %vm224, 1, 0
        %v321 = vsel %vm225, 1, 0
        %v322 = vsel %vm226, 1, 0
        %v323 = vsel %vm227, 1, 0
        %v324 = vsel %vm228, 1, 0
        %v325 = vsel %vm229, 1, 0
        %v326 = vsel %vm230, 1, 0
        %v327 = vsel %vm231, 1, 0
        %v328 = vsel %vm232, 1, 0
        %v329 = vsel %vm233, 1, 0
        %v330 = vsel %vm234, 1, 0
        %vm331 = vcmp.eq.s32.totalorder %v299, 1
        %vm332 = vcmp.eq.s32.totalorder %v300, 1
        %vm333 = vcmp.eq.s32.totalorder %v301, 1
        %vm334 = vcmp.eq.s32.totalorder %v302, 1
        %vm335 = vcmp.eq.s32.totalorder %v303, 1
        %vm336 = vcmp.eq.s32.totalorder %v304, 1
        %vm337 = vcmp.eq.s32.totalorder %v305, 1
        %vm338 = vcmp.eq.s32.totalorder %v306, 1
        %vm339 = vcmp.eq.s32.totalorder %v307, 1
        %vm340 = vcmp.eq.s32.totalorder %v308, 1
        %vm341 = vcmp.eq.s32.totalorder %v309, 1
        %vm342 = vcmp.eq.s32.totalorder %v310, 1
        %vm343 = vcmp.eq.s32.totalorder %v311, 1
        %vm344 = vcmp.eq.s32.totalorder %v312, 1
        %vm345 = vcmp.eq.s32.totalorder %v313, 1
        %vm346 = vcmp.eq.s32.totalorder %v314, 1
        %vm347 = vcmp.eq.s32.totalorder %v315, 1
        %vm348 = vcmp.eq.s32.totalorder %v316, 1
        %vm349 = vcmp.eq.s32.totalorder %v317, 1
        %vm350 = vcmp.eq.s32.totalorder %v318, 1
        %vm351 = vcmp.eq.s32.totalorder %v319, 1
        %vm352 = vcmp.eq.s32.totalorder %v320, 1
        %vm353 = vcmp.eq.s32.totalorder %v321, 1
        %vm354 = vcmp.eq.s32.totalorder %v322, 1
        %vm355 = vcmp.eq.s32.totalorder %v323, 1
        %vm356 = vcmp.eq.s32.totalorder %v324, 1
        %vm357 = vcmp.eq.s32.totalorder %v325, 1
        %vm358 = vcmp.eq.s32.totalorder %v326, 1
        %vm359 = vcmp.eq.s32.totalorder %v327, 1
        %vm360 = vcmp.eq.s32.totalorder %v328, 1
        %vm361 = vcmp.eq.s32.totalorder %v329, 1
        %vm362 = vcmp.eq.s32.totalorder %v330, 1
        %v363 = vsel %vm331, %v267, 0.0
        %v364 = vsel %vm332, %v268, 0.0
        %v365 = vsel %vm333, %v269, 0.0
        %v366 = vsel %vm334, %v270, 0.0
        %v367 = vsel %vm335, %v271, 0.0
        %v368 = vsel %vm336, %v272, 0.0
        %v369 = vsel %vm337, %v273, 0.0
        %v370 = vsel %vm338, %v274, 0.0
        %v371 = vsel %vm339, %v275, 0.0
        %v372 = vsel %vm340, %v276, 0.0
        %v373 = vsel %vm341, %v277, 0.0
        %v374 = vsel %vm342, %v278, 0.0
        %v375 = vsel %vm343, %v279, 0.0
        %v376 = vsel %vm344, %v280, 0.0
        %v377 = vsel %vm345, %v281, 0.0
        %v378 = vsel %vm346, %v282, 0.0
        %v379 = vsel %vm347, %v283, 0.0
        %v380 = vsel %vm348, %v284, 0.0
        %v381 = vsel %vm349, %v285, 0.0
        %v382 = vsel %vm350, %v286, 0.0
        %v383 = vsel %vm351, %v287, 0.0
        %v384 = vsel %vm352, %v288, 0.0
        %v385 = vsel %vm353, %v289, 0.0
        %v386 = vsel %vm354, %v290, 0.0
        %v387 = vsel %vm355, %v291, 0.0
        %v388 = vsel %vm356, %v292, 0.0
        %v389 = vsel %vm357, %v293, 0.0
        %v390 = vsel %vm358, %v294, 0.0
        %v391 = vsel %vm359, %v295, 0.0
        %v392 = vsel %vm360, %v296, 0.0
        %v393 = vsel %vm361, %v297, 0.0
        %v394 = vsel %vm362, %v298, 0.0
        %v395 = vadd.f32 %v363, %v364
        %v396 = vadd.f32 %v395, %v365
        %v397 = vadd.f32 %v396, %v366
        %v398 = vadd.f32 %v397, %v367
        %v399 = vadd.f32 %v398, %v368
        %v400 = vadd.f32 %v399, %v369
        %v401 = vadd.f32 %v400, %v370
        %v402 = vadd.f32 %v401, %v371
        %v403 = vadd.f32 %v402, %v372
        %v404 = vadd.f32 %v403, %v373
        %v405 = vadd.f32 %v404, %v374
        %v406 = vadd.f32 %v405, %v375
        %v407 = vadd.f32 %v406, %v376
        %v408 = vadd.f32 %v407, %v377
        %v409 = vadd.f32 %v408, %v378
        %v410 = vadd.f32 %v409, %v379
        %v411 = vadd.f32 %v410, %v380
        %v412 = vadd.f32 %v411, %v381
        %v413 = vadd.f32 %v412, %v382
        %v414 = vadd.f32 %v413, %v383
        %v415 = vadd.f32 %v414, %v384
        %v416 = vadd.f32 %v415, %v385
        %v417 = vadd.f32 %v416, %v386
        %v418 = vadd.f32 %v417, %v387
        %v419 = vadd.f32 %v418, %v388
        %v420 = vadd.f32 %v419, %v389
        %v421 = vadd.f32 %v420, %v390
        %v422 = vadd.f32 %v421, %v391
        %v423 = vadd.f32 %v422, %v392
        %v424 = vadd.f32 %v423, %v393
        %v425 = vadd.f32 %v424, %v394
        %v426 = vrot.slane %v425, 4
        %v427 = vadd.f32 %v425, %v426
        %v428 = vrot.slane %v427, 2
        %v429 = vadd.f32 %v427, %v428
        %v430 = vrot.slane %v429, 1
        %v431 = vadd.f32 %v429, %v430
        %432 = vst [vmem:[%s134] sm:$0x1] %v431
        %v433 = vmul.f32 %v363, %v363
        %v434 = vmul.f32 %v364, %v364
        %v435 = vmul.f32 %v365, %v365
        %v436 = vmul.f32 %v366, %v366
        %v437 = vmul.f32 %v367, %v367
        %v438 = vmul.f32 %v368, %v368
        %v439 = vmul.f32 %v369, %v369
        %v440 = vmul.f32 %v370, %v370
        %v441 = vmul.f32 %v371, %v371
        %v442 = vmul.f32 %v372, %v372
        %v443 = vmul.f32 %v373, %v373
        %v444 = vmul.f32 %v374, %v374
        %v445 = vmul.f32 %v375, %v375
        %v446 = vmul.f32 %v376, %v376
        %v447 = vmul.f32 %v377, %v377
        %v448 = vmul.f32 %v378, %v378
        %v449 = vmul.f32 %v379, %v379
        %v450 = vmul.f32 %v380, %v380
        %v451 = vmul.f32 %v381, %v381
        %v452 = vmul.f32 %v382, %v382
        %v453 = vmul.f32 %v383, %v383
        %v454 = vmul.f32 %v384, %v384
        %v455 = vmul.f32 %v385, %v385
        %v456 = vmul.f32 %v386, %v386
        %v457 = vmul.f32 %v387, %v387
        %v458 = vmul.f32 %v388, %v388
        %v459 = vmul.f32 %v389, %v389
        %v460 = vmul.f32 %v390, %v390
        %v461 = vmul.f32 %v391, %v391
        %v462 = vmul.f32 %v392, %v392
        %v463 = vmul.f32 %v393, %v393
        %v464 = vmul.f32 %v394, %v394
        %v465 = vadd.f32 %v433, %v434
        %v466 = vadd.f32 %v465, %v435
        %v467 = vadd.f32 %v466, %v436
        %v468 = vadd.f32 %v467, %v437
        %v469 = vadd.f32 %v468, %v438
        %v470 = vadd.f32 %v469, %v439
        %v471 = vadd.f32 %v470, %v440
        %v472 = vadd.f32 %v471, %v441
        %v473 = vadd.f32 %v472, %v442
        %v474 = vadd.f32 %v473, %v443
        %v475 = vadd.f32 %v474, %v444
        %v476 = vadd.f32 %v475, %v445
        %v477 = vadd.f32 %v476, %v446
        %v478 = vadd.f32 %v477, %v447
        %v479 = vadd.f32 %v478, %v448
        %v480 = vadd.f32 %v479, %v449
        %v481 = vadd.f32 %v480, %v450
        %v482 = vadd.f32 %v481, %v451
        %v483 = vadd.f32 %v482, %v452
        %v484 = vadd.f32 %v483, %v453
        %v485 = vadd.f32 %v484, %v454
        %v486 = vadd.f32 %v485, %v455
        %v487 = vadd.f32 %v486, %v456
        %v488 = vadd.f32 %v487, %v457
        %v489 = vadd.f32 %v488, %v458
        %v490 = vadd.f32 %v489, %v459
        %v491 = vadd.f32 %v490, %v460
        %v492 = vadd.f32 %v491, %v461
        %v493 = vadd.f32 %v492, %v462
        %v494 = vadd.f32 %v493, %v463
        %v495 = vadd.f32 %v494, %v464
        %v496 = vrot.slane %v495, 4
        %v497 = vadd.f32 %v495, %v496
        %v498 = vrot.slane %v497, 2
        %v499 = vadd.f32 %v497, %v498
        %v500 = vrot.slane %v499, 1
        %v501 = vadd.f32 %v499, %v500
        %502 = vst [vmem:[%s134 + $0x1] sm:$0x1] %v501
        %s503 = sand.u32 %s52, 1
        %s504 = scalar_lea.sflag [#allocation4], %s503
        %s505 = sand.u32 %s52, 1
        %s506 = smul.addr %s505, 8
        %s507 = scalar_lea.vmem [#allocation5], %s506
        // Predicated region
        $region29: #{tpu_custom_call.1} parent=23 // pred_check
          %p508 = pneg %p62
        $region30: #{tpu_custom_call.1} parent=23 // pred_check_branch
          %510 = sbr.rel (%p508) target = $region32
        $region31: #{tpu_custom_call.1} parent=23 // pred_region
          %s512 = ssub.s32 128, 128
          %513 = vsyncadd %s504, %s512
          %s514 = smul.addr %s18, 128
          %s515 = scalar_lea.hbm %s1, %s514
          %s517 = sshll.u32 %s507, 4
          %s518 = int_to_ptr.vmem [resolvable:$true] %s517
          %520 = dma.vmem_to_hbm [thread:$0]  %s518, 128, %s515, %s504
        $region32: #{tpu_custom_call.1} parent=23 // pred_fallthru
          _
      $region24: #{tpu_custom_call.1} parent=5 // pred_fallthru
        _
      %p521 = scmp.le.s32.totalorder 2, %s13
      // Predicated region
      $region33: #{tpu_custom_call.1} parent=5 // pred_check
        %p522 = pneg %p521
      $region34: #{tpu_custom_call.1} parent=5 // pred_check_branch
        %524 = sbr.rel (%p522) target = $region36
      $region35: #{tpu_custom_call.1} parent=5 // pred_region
        %s525 = ssub.s32 %s13, 2
        // Predicated region
        $region37: #{tpu_custom_call.1} parent=35 // pred_check
          %p526 = pneg %p68
        $region38: #{tpu_custom_call.1} parent=35 // pred_check_branch
          %528 = sbr.rel (%p526) target = $region40
        $region39: #{tpu_custom_call.1} parent=35 // pred_region
          %s529 = sand.u32 %s53, 1
          %s530 = scalar_lea.sflag [#allocation4], %s529
          %s531 = sand.u32 %s53, 1
          %s532 = smul.addr %s531, 8
          %s533 = scalar_lea.vmem [#allocation5], %s532
          %534 = dma.done %s530, 128
        $region40: #{tpu_custom_call.1} parent=35 // pred_fallthru
          _
      $region36: #{tpu_custom_call.1} parent=5 // pred_fallthru
        _
    $region6: #{tpu_custom_call.1} parent=1 // loop_footer
      %s17 = sadd.s32 1, %s13
    $region7: #{tpu_custom_call.1} parent=1 // loop_footer_branch
      %12 = sbr.rel target = $region3
    $region8: #{tpu_custom_call.1} parent=1 // loop_exit
      _
    %535 = vsyncpa [#allocation3], 1
    %s536 = scalar_lea.sflag [#allocation3], 1
    %537 = vsyncpa %s536, 1
    %538 = vsyncpa [#allocation4], 1
    %s539 = scalar_lea.sflag [#allocation4], 1
    %540 = vsyncpa %s539, 1

</llo_original>
